<compile_context>
chip_gen: v6e
topology: v6e:2x2x1
jax: 0.10.0
libtpu: 0.0.40
codegen_flags: <defaults>
</compile_context>

<pallas_src>
import functools

import jax
import jax.numpy as jnp
from jax.experimental import pallas as pl
from jax.experimental.pallas import tpu as pltpu


def tcn_fused_kernel(x_ref, *refs, layer_cfg, K, L0, LBUF, eps):
    """Fused TCN forward.

    x_ref     : (Cin0, B*LBUF)   f32  lane-dense, already zero-padded level-0 input
    per level : K tap weights (Cout, Cin), gamma (Cout, 1), beta (Cout, 1)
    out_ref   : (C_last, B*LBUF) f32  lane-dense output slab
    act_ref   : (C_ACT, B*LBUF)  f32  scratch: staged (padded) activations
    """
    n_layers = len(layer_cfg)
    nppl = K + 2                                  # refs per layer: K taps, gamma, beta
    param_refs = refs[:nppl * n_layers]
    out_ref, act_ref = refs[nppl * n_layers:]

    LANES = x_ref.shape[1]
    B = LANES // LBUF

    # Hoisted once (JAX does not CSE broadcast/iota): lane position within each
    # 128-aligned batch segment.
    pos = jax.lax.broadcasted_iota(jnp.int32, (1, LANES), 1) % LBUF

    Lin = L0
    for li, (cin, cout, d) in enumerate(layer_cfg):          # static layer loop
        p = (K - 1) * d
        Lout = Lin + p                                       # no Chomp1d
        base = nppl * li
        w_refs = param_refs[base:base + K]
        g_ref = param_refs[base + K]
        bt_ref = param_refs[base + K + 1]

        # Level 0 reads the wrapper-staged slab directly; later levels read the
        # activation scratch.  Rows above `cin` are never read -> no zeroing.
        act = x_ref[...] if li == 0 else act_ref[0:cin, :]

        # Dilated conv as K accumulated MXU matmuls.  Tap k needs `act` shifted
        # left by k*d; the roll wraps only lanes that land in positions >= Lout,
        # which are masked below.
        y = jnp.dot(w_refs[0][...], act, preferred_element_type=jnp.float32)
        for k in range(1, K):
            tap = pltpu.roll(act, shift=LANES - k * d, axis=1)   # left-shift k*d
            y = y + jnp.dot(w_refs[k][...], tap,
                            preferred_element_type=jnp.float32)
        # Conv bias intentionally omitted: exactly cancelled by train-mode BN.

        valid = pos < Lout                          # (1, LANES), broadcasts over rows
        y = jnp.where(valid, y, 0.0)                # zero garbage / tail lanes once

        # BatchNorm1d (training-mode biased stats over batch*length), single pass.
        inv_n = 1.0 / float(B * Lout)
        mean = jnp.sum(y, axis=1, keepdims=True) * inv_n
        var = jnp.sum(y * y, axis=1, keepdims=True) * inv_n - mean * mean
        scale = g_ref[...] * jax.lax.rsqrt(var + eps)      # fused scale (hoisted)
        shift = bt_ref[...] - mean * scale                 # fused shift (hoisted)
        y = jnp.where(valid, jnp.maximum(y * scale + shift, 0.0), 0.0)
        # (Dropout: identity — see TODO at top.)

        if li == n_layers - 1:
            out_ref[...] = y                               # unmasked full-lane store
        else:
            # Stage the next level's zero-padded input with ONE full-lane store.
            # Lanes rolled in from the previous segment tail are >= Lout and
            # therefore already zero (LBUF >= Lout + p_next, asserted host-side).
            p_next = (K - 1) * layer_cfg[li + 1][2]
            staged = pltpu.roll(y, shift=p_next, axis=1) if p_next else y
            act_ref[0:cout, :] = staged
        Lin = Lout


def tcn_forward(params, x, kernel_size, eps=1e-5):
    """All TCN levels in a single Pallas call; returns (B, C_last, L_final)."""
    B, cin, L0 = x.shape
    K = kernel_size
    n_layers = len(params)

    layer_cfg = []
    Lin, Lpad_max = L0, 0
    for i, (w, _, _, _) in enumerate(params):
        d = 2 ** i
        p = (K - 1) * d
        cout = w.shape[0]
        layer_cfg.append((cin, cout, d))
        Lpad_max = max(Lpad_max, Lin + 2 * p)
        Lin += p
        cin = cout
    L_final = Lin
    C_last = layer_cfg[-1][1]

    LBUF = ((Lpad_max + 127) // 128) * 128          # 128-aligned segment per batch
    LANES = B * LBUF

    # Static guards: roll-based taps/staging must never leak stale lanes into
    # valid output positions (see review correctness note).
    Lc = L0
    for (ci, co, d) in layer_cfg:
        p = (K - 1) * d
        assert LBUF >= Lc + 2 * p, (LBUF, Lc, p)
        Lc += p

    # Layer-0 input staged wrapper-side as a lane-dense, already-padded slab:
    # batch b's data lives at lanes [b*LBUF + p0, b*LBUF + p0 + L0).
    cin0, p0 = layer_cfg[0][0], (K - 1) * layer_cfg[0][2]
    x_pad = jnp.pad(x, ((0, 0), (0, 0), (p0, LBUF - L0 - p0)))   # (B, Cin0, LBUF)
    x_slab = jnp.transpose(x_pad, (1, 0, 2)).reshape(cin0, LANES)

    # Host-side weight split per tap: (Cout, Cin, K) -> K x (Cout, Cin).
    # Conv bias is dropped entirely (cancelled by train-mode BatchNorm).
    flat_params = []
    for (w, _b, g, bt) in params:
        cout = w.shape[0]
        flat_params.extend(w[:, :, k] for k in range(K))
        flat_params += [g.reshape(cout, 1), bt.reshape(cout, 1)]

    # Activation scratch only needs rows for the intermediate layers.
    C_ACT = max((co for _, co, _ in layer_cfg[:-1]), default=8)

    # Advisory cost estimate for the XLA scheduler.
    flops, transc = 0, 0
    Lc = L0
    for (ci, co, d) in layer_cfg:
        Lo = Lc + (K - 1) * d
        flops += 2 * co * ci * K * B * Lo + 8 * co * B * Lo
        transc += co
        Lc = Lo
    bytes_accessed = 4 * (x_slab.size + sum(fp.size for fp in flat_params)
                          + C_last * LANES)

    kern = functools.partial(tcn_fused_kernel, layer_cfg=tuple(layer_cfg),
                             K=K, L0=L0, LBUF=LBUF, eps=eps)
    vmem = pl.BlockSpec(memory_space=pltpu.MemorySpace.VMEM)
    out2d = pl.pallas_call(
        kern,
        out_shape=jax.ShapeDtypeStruct((C_last, LANES), jnp.float32),
        in_specs=[vmem] * (1 + (K + 2) * n_layers),
        out_specs=vmem,
        scratch_shapes=[pltpu.VMEM((C_ACT, LANES), jnp.float32)],
        cost_estimate=pl.CostEstimate(flops=flops, transcendentals=transc,
                                      bytes_accessed=bytes_accessed),
    )(x_slab, *flat_params)

    # Wrapper-side layout plumbing back to the module's (B, C, L) contract.
    out = out2d.reshape(C_last, B, LBUF)[:, :, :L_final]
    return jnp.transpose(out, (1, 0, 2))


def init_tcn_params(key, num_inputs, num_channels, kernel_size):
    """Deterministic synthetic parameters (shapes match the PyTorch module)."""
    params = []
    in_ch = num_inputs
    for out_ch in num_channels:
        key, kw, kb, kg, kbt = jax.random.split(key, 5)
        fan_in = in_ch * kernel_size
        bound = 1.0 / (fan_in ** 0.5)
        w = jax.random.uniform(kw, (out_ch, in_ch, kernel_size), jnp.float32,
                               -bound, bound)
        b = jax.random.uniform(kb, (out_ch,), jnp.float32, -bound, bound)
        gamma = 1.0 + 0.1 * jax.random.normal(kg, (out_ch,), jnp.float32)
        beta = 0.1 * jax.random.normal(kbt, (out_ch,), jnp.float32)
        params.append((w, b, gamma, beta))
        in_ch = out_ch
    return params


def tcn_forward_ref(params, x, kernel_size, eps=1e-5):
    """Pure-JAX reference (mirrors PyTorch train-mode forward, dropout=id)."""
    y = x
    for i, (w, b, gamma, beta) in enumerate(params):
        d = 2 ** i
        pad = (kernel_size - 1) * d
        y = jax.lax.conv_general_dilated(
            y, w, window_strides=(1,), padding=[(pad, pad)],
            rhs_dilation=(d,), dimension_numbers=('NCH', 'OIH', 'NCH'))
        y = y + b[None, :, None]
        m = jnp.mean(y, axis=(0, 2), keepdims=True)
        v = jnp.mean((y - m) ** 2, axis=(0, 2), keepdims=True)
        y = (y - m) * jax.lax.rsqrt(v + eps) * gamma[None, :, None] \
            + beta[None, :, None]
        y = jnp.maximum(y, 0.0)
    return y


if __name__ == "__main__":
    # Small shapes consistent with the module's forward contract.
    batch, num_inputs, seq_len = 2, 4, 16
    num_channels = [8, 16]
    kernel_size = 3
    dropout = 0.2  # identity at inference / TODO above

    key = jax.random.PRNGKey(0)
    key, kx = jax.random.split(key)
    x = jax.random.normal(kx, (batch, num_inputs, seq_len), jnp.float32)
    params = init_tcn_params(key, num_inputs, num_channels, kernel_size)

    out = tcn_forward(params, x, kernel_size)
    out = jax.block_until_ready(out)

    # Expected output length: seq_len + sum_i (K-1)*2^i = 16 + 2 + 4 = 22
    expected_shape = (batch, num_channels[-1],
                      seq_len + sum((kernel_size - 1) * 2 ** i
                                    for i in range(len(num_channels))))
    assert out.shape == expected_shape, (out.shape, expected_shape)

    ref = jax.block_until_ready(tcn_forward_ref(params, x, kernel_size))
    assert jnp.allclose(out, ref, rtol=1e-4, atol=1e-4), \
        float(jnp.max(jnp.abs(out - ref)))

    print("KERNEL_OK")
</pallas_src>

<mosaic_0001>
module attributes {stable_mosaic.version = 11 : i64} {
  func.func @tcn_fused_kernel(%arg0: memref<4x256xf32, #tpu.memory_space<vmem>>, %arg1: memref<8x4xf32, #tpu.memory_space<vmem>>, %arg2: memref<8x4xf32, #tpu.memory_space<vmem>>, %arg3: memref<8x4xf32, #tpu.memory_space<vmem>>, %arg4: memref<8x1xf32, #tpu.memory_space<vmem>>, %arg5: memref<8x1xf32, #tpu.memory_space<vmem>>, %arg6: memref<16x8xf32, #tpu.memory_space<vmem>>, %arg7: memref<16x8xf32, #tpu.memory_space<vmem>>, %arg8: memref<16x8xf32, #tpu.memory_space<vmem>>, %arg9: memref<16x1xf32, #tpu.memory_space<vmem>>, %arg10: memref<16x1xf32, #tpu.memory_space<vmem>>, %arg11: memref<16x256xf32, #tpu.memory_space<vmem>>, %arg12: memref<8x256xf32, #tpu.memory_space<vmem>>) attributes {dimension_semantics = [], scalar_prefetch = 0 : i64, scratch_operands = 1 : i64, tpu.core_type = #tpu.core_type<tc>} {
    %0 = tpu.iota {dimensions = array<i32: 1>} : vector<1x256xi32>
    %c128_i32 = arith.constant 128 : i32
    %c0_i32 = arith.constant 0 : i32
    %1 = arith.cmpi eq, %c128_i32, %c0_i32 : i32
    %c1_i32 = arith.constant 1 : i32
    %2 = arith.select %1, %c1_i32, %c128_i32 : i32
    %3 = vector.broadcast %2 : i32 to vector<1x256xi32>
    %4 = arith.remsi %0, %3 : vector<1x256xi32>
    %c0_i32_0 = arith.constant 0 : i32
    %5 = vector.broadcast %c0_i32_0 : i32 to vector<1x256xi32>
    %6 = arith.cmpi ne, %4, %5 : vector<1x256xi32>
    %c0_i32_1 = arith.constant 0 : i32
    %7 = vector.broadcast %c0_i32_1 : i32 to vector<1x256xi32>
    %8 = arith.cmpi slt, %4, %7 : vector<1x256xi32>
    %c0_i32_2 = arith.constant 0 : i32
    %9 = arith.cmpi slt, %2, %c0_i32_2 : i32
    %10 = vector.broadcast %9 : i1 to vector<1x256xi1>
    %11 = vector.broadcast %10 : vector<1x256xi1> to vector<1x256xi1>
    %12 = arith.xori %8, %11 : vector<1x256xi1>
    %13 = arith.andi %12, %6 : vector<1x256xi1>
    %14 = vector.broadcast %2 : i32 to vector<1x256xi32>
    %15 = arith.addi %4, %14 : vector<1x256xi32>
    %16 = arith.select %13, %15, %4 : vector<1x256xi1>, vector<1x256xi32>
    %c0 = arith.constant 0 : index
    %c0_3 = arith.constant 0 : index
    %17 = vector.load %arg0[%c0, %c0_3] : memref<4x256xf32, #tpu.memory_space<vmem>>, vector<4x256xf32>
    %c0_4 = arith.constant 0 : index
    %c0_5 = arith.constant 0 : index
    %18 = vector.load %arg1[%c0_4, %c0_5] : memref<8x4xf32, #tpu.memory_space<vmem>>, vector<8x4xf32>
    %cst = arith.constant dense<0.000000e+00> : vector<8x256xf32>
    %19 = tpu.matmul %18, %17, %cst {dimension_numbers = #tpu.dot_dimension_numbers<[1], [0], [0], [1], [0, 0, 1, 1], [], []>} : vector<8x4xf32>, vector<4x256xf32>, vector<8x256xf32> -> vector<8x256xf32>
    %c255_i32 = arith.constant 255 : i32
    %20 = tpu.dynamic_rotate %17 by %c255_i32 dim 1 : vector<4x256xf32>, i32 -> vector<4x256xf32>
    %c0_6 = arith.constant 0 : index
    %c0_7 = arith.constant 0 : index
    %21 = vector.load %arg2[%c0_6, %c0_7] : memref<8x4xf32, #tpu.memory_space<vmem>>, vector<8x4xf32>
    %cst_8 = arith.constant dense<0.000000e+00> : vector<8x256xf32>
    %22 = tpu.matmul %21, %20, %cst_8 {dimension_numbers = #tpu.dot_dimension_numbers<[1], [0], [0], [1], [0, 0, 1, 1], [], []>} : vector<8x4xf32>, vector<4x256xf32>, vector<8x256xf32> -> vector<8x256xf32>
    %23 = arith.addf %19, %22 : vector<8x256xf32>
    %c254_i32 = arith.constant 254 : i32
    %24 = tpu.dynamic_rotate %17 by %c254_i32 dim 1 : vector<4x256xf32>, i32 -> vector<4x256xf32>
    %c0_9 = arith.constant 0 : index
    %c0_10 = arith.constant 0 : index
    %25 = vector.load %arg3[%c0_9, %c0_10] : memref<8x4xf32, #tpu.memory_space<vmem>>, vector<8x4xf32>
    %cst_11 = arith.constant dense<0.000000e+00> : vector<8x256xf32>
    %26 = tpu.matmul %25, %24, %cst_11 {dimension_numbers = #tpu.dot_dimension_numbers<[1], [0], [0], [1], [0, 0, 1, 1], [], []>} : vector<8x4xf32>, vector<4x256xf32>, vector<8x256xf32> -> vector<8x256xf32>
    %27 = arith.addf %23, %26 : vector<8x256xf32>
    %c18_i32 = arith.constant 18 : i32
    %28 = vector.broadcast %c18_i32 : i32 to vector<1x256xi32>
    %29 = arith.cmpi slt, %16, %28 : vector<1x256xi32>
    %cst_12 = arith.constant 0.000000e+00 : f32
    %30 = vector.shape_cast %29 : vector<1x256xi1> to vector<1x256xi1>
    %31 = vector.broadcast %30 : vector<1x256xi1> to vector<8x256xi1>
    %32 = vector.broadcast %cst_12 : f32 to vector<8x256xf32>
    %33 = arith.select %31, %27, %32 : vector<8x256xi1>, vector<8x256xf32>
    %cst_13 = arith.constant dense<0.000000e+00> : vector<8xf32>
    %34 = vector.multi_reduction <add>, %33, %cst_13 [1] : vector<8x256xf32> to vector<8xf32>
    %35 = vector.shape_cast %34 : vector<8xf32> to vector<8x1xf32>
    %cst_14 = arith.constant 0.027777778 : f32
    %36 = vector.broadcast %cst_14 : f32 to vector<8x1xf32>
    %37 = arith.mulf %35, %36 : vector<8x1xf32>
    %38 = arith.mulf %33, %33 : vector<8x256xf32>
    %cst_15 = arith.constant dense<0.000000e+00> : vector<8xf32>
    %39 = vector.multi_reduction <add>, %38, %cst_15 [1] : vector<8x256xf32> to vector<8xf32>
    %40 = vector.shape_cast %39 : vector<8xf32> to vector<8x1xf32>
    %cst_16 = arith.constant 0.027777778 : f32
    %41 = vector.broadcast %cst_16 : f32 to vector<8x1xf32>
    %42 = arith.mulf %40, %41 : vector<8x1xf32>
    %43 = arith.mulf %37, %37 : vector<8x1xf32>
    %44 = arith.subf %42, %43 : vector<8x1xf32>
    %c0_17 = arith.constant 0 : index
    %c0_18 = arith.constant 0 : index
    %45 = vector.load %arg4[%c0_17, %c0_18] : memref<8x1xf32, #tpu.memory_space<vmem>>, vector<8x1xf32>
    %cst_19 = arith.constant 9.99999974E-6 : f32
    %46 = vector.broadcast %cst_19 : f32 to vector<8x1xf32>
    %47 = arith.addf %44, %46 : vector<8x1xf32>
    %48 = math.rsqrt %47 : vector<8x1xf32>
    %49 = arith.mulf %45, %48 : vector<8x1xf32>
    %c0_20 = arith.constant 0 : index
    %c0_21 = arith.constant 0 : index
    %50 = vector.load %arg5[%c0_20, %c0_21] : memref<8x1xf32, #tpu.memory_space<vmem>>, vector<8x1xf32>
    %51 = arith.mulf %37, %49 : vector<8x1xf32>
    %52 = arith.subf %50, %51 : vector<8x1xf32>
    %53 = vector.broadcast %49 : vector<8x1xf32> to vector<8x256xf32>
    %54 = arith.mulf %33, %53 : vector<8x256xf32>
    %55 = vector.broadcast %52 : vector<8x1xf32> to vector<8x256xf32>
    %56 = arith.addf %54, %55 : vector<8x256xf32>
    %cst_22 = arith.constant 0.000000e+00 : f32
    %57 = vector.broadcast %cst_22 : f32 to vector<8x256xf32>
    %58 = arith.maximumf %56, %57 : vector<8x256xf32>
    %cst_23 = arith.constant 0.000000e+00 : f32
    %59 = vector.shape_cast %29 : vector<1x256xi1> to vector<1x256xi1>
    %60 = vector.broadcast %59 : vector<1x256xi1> to vector<8x256xi1>
    %61 = vector.broadcast %cst_23 : f32 to vector<8x256xf32>
    %62 = arith.select %60, %58, %61 : vector<8x256xi1>, vector<8x256xf32>
    %c4_i32 = arith.constant 4 : i32
    %63 = tpu.dynamic_rotate %62 by %c4_i32 dim 1 : vector<8x256xf32>, i32 -> vector<8x256xf32>
    %c0_24 = arith.constant 0 : index
    %c0_25 = arith.constant 0 : index
    %64 = vector.load %arg12[%c0_24, %c0_25] : memref<8x256xf32, #tpu.memory_space<vmem>>, vector<8x256xf32>
    tpu.vector_store %arg12[%c0_24, %c0_25], %63 {strides = array<i32>} : memref<8x256xf32, #tpu.memory_space<vmem>>, vector<8x256xf32>,
    %c0_26 = arith.constant 0 : index
    %c0_27 = arith.constant 0 : index
    %65 = vector.load %arg12[%c0_26, %c0_27] : memref<8x256xf32, #tpu.memory_space<vmem>>, vector<8x256xf32>
    %c0_28 = arith.constant 0 : index
    %c0_29 = arith.constant 0 : index
    %66 = vector.load %arg6[%c0_28, %c0_29] : memref<16x8xf32, #tpu.memory_space<vmem>>, vector<16x8xf32>
    %cst_30 = arith.constant dense<0.000000e+00> : vector<16x256xf32>
    %67 = tpu.matmul %66, %65, %cst_30 {dimension_numbers = #tpu.dot_dimension_numbers<[1], [0], [0], [1], [0, 0, 1, 1], [], []>} : vector<16x8xf32>, vector<8x256xf32>, vector<16x256xf32> -> vector<16x256xf32>
    %c254_i32_31 = arith.constant 254 : i32
    %68 = tpu.dynamic_rotate %65 by %c254_i32_31 dim 1 : vector<8x256xf32>, i32 -> vector<8x256xf32>
    %c0_32 = arith.constant 0 : index
    %c0_33 = arith.constant 0 : index
    %69 = vector.load %arg7[%c0_32, %c0_33] : memref<16x8xf32, #tpu.memory_space<vmem>>, vector<16x8xf32>
    %cst_34 = arith.constant dense<0.000000e+00> : vector<16x256xf32>
    %70 = tpu.matmul %69, %68, %cst_34 {dimension_numbers = #tpu.dot_dimension_numbers<[1], [0], [0], [1], [0, 0, 1, 1], [], []>} : vector<16x8xf32>, vector<8x256xf32>, vector<16x256xf32> -> vector<16x256xf32>
    %71 = arith.addf %67, %70 : vector<16x256xf32>
    %c252_i32 = arith.constant 252 : i32
    %72 = tpu.dynamic_rotate %65 by %c252_i32 dim 1 : vector<8x256xf32>, i32 -> vector<8x256xf32>
    %c0_35 = arith.constant 0 : index
    %c0_36 = arith.constant 0 : index
    %73 = vector.load %arg8[%c0_35, %c0_36] : memref<16x8xf32, #tpu.memory_space<vmem>>, vector<16x8xf32>
    %cst_37 = arith.constant dense<0.000000e+00> : vector<16x256xf32>
    %74 = tpu.matmul %73, %72, %cst_37 {dimension_numbers = #tpu.dot_dimension_numbers<[1], [0], [0], [1], [0, 0, 1, 1], [], []>} : vector<16x8xf32>, vector<8x256xf32>, vector<16x256xf32> -> vector<16x256xf32>
    %75 = arith.addf %71, %74 : vector<16x256xf32>
    %c22_i32 = arith.constant 22 : i32
    %76 = vector.broadcast %c22_i32 : i32 to vector<1x256xi32>
    %77 = arith.cmpi slt, %16, %76 : vector<1x256xi32>
    %cst_38 = arith.constant 0.000000e+00 : f32
    %78 = vector.shape_cast %77 : vector<1x256xi1> to vector<1x256xi1>
    %79 = vector.broadcast %78 : vector<1x256xi1> to vector<16x256xi1>
    %80 = vector.broadcast %cst_38 : f32 to vector<16x256xf32>
    %81 = arith.select %79, %75, %80 : vector<16x256xi1>, vector<16x256xf32>
    %cst_39 = arith.constant dense<0.000000e+00> : vector<16xf32>
    %82 = vector.multi_reduction <add>, %81, %cst_39 [1] : vector<16x256xf32> to vector<16xf32>
    %83 = vector.shape_cast %82 : vector<16xf32> to vector<16x1xf32>
    %cst_40 = arith.constant 0.0227272734 : f32
    %84 = vector.broadcast %cst_40 : f32 to vector<16x1xf32>
    %85 = arith.mulf %83, %84 : vector<16x1xf32>
    %86 = arith.mulf %81, %81 : vector<16x256xf32>
    %cst_41 = arith.constant dense<0.000000e+00> : vector<16xf32>
    %87 = vector.multi_reduction <add>, %86, %cst_41 [1] : vector<16x256xf32> to vector<16xf32>
    %88 = vector.shape_cast %87 : vector<16xf32> to vector<16x1xf32>
    %cst_42 = arith.constant 0.0227272734 : f32
    %89 = vector.broadcast %cst_42 : f32 to vector<16x1xf32>
    %90 = arith.mulf %88, %89 : vector<16x1xf32>
    %91 = arith.mulf %85, %85 : vector<16x1xf32>
    %92 = arith.subf %90, %91 : vector<16x1xf32>
    %c0_43 = arith.constant 0 : index
    %c0_44 = arith.constant 0 : index
    %93 = vector.load %arg9[%c0_43, %c0_44] : memref<16x1xf32, #tpu.memory_space<vmem>>, vector<16x1xf32>
    %cst_45 = arith.constant 9.99999974E-6 : f32
    %94 = vector.broadcast %cst_45 : f32 to vector<16x1xf32>
    %95 = arith.addf %92, %94 : vector<16x1xf32>
    %96 = math.rsqrt %95 : vector<16x1xf32>
    %97 = arith.mulf %93, %96 : vector<16x1xf32>
    %c0_46 = arith.constant 0 : index
    %c0_47 = arith.constant 0 : index
    %98 = vector.load %arg10[%c0_46, %c0_47] : memref<16x1xf32, #tpu.memory_space<vmem>>, vector<16x1xf32>
    %99 = arith.mulf %85, %97 : vector<16x1xf32>
    %100 = arith.subf %98, %99 : vector<16x1xf32>
    %101 = vector.broadcast %97 : vector<16x1xf32> to vector<16x256xf32>
    %102 = arith.mulf %81, %101 : vector<16x256xf32>
    %103 = vector.broadcast %100 : vector<16x1xf32> to vector<16x256xf32>
    %104 = arith.addf %102, %103 : vector<16x256xf32>
    %cst_48 = arith.constant 0.000000e+00 : f32
    %105 = vector.broadcast %cst_48 : f32 to vector<16x256xf32>
    %106 = arith.maximumf %104, %105 : vector<16x256xf32>
    %cst_49 = arith.constant 0.000000e+00 : f32
    %107 = vector.shape_cast %77 : vector<1x256xi1> to vector<1x256xi1>
    %108 = vector.broadcast %107 : vector<1x256xi1> to vector<16x256xi1>
    %109 = vector.broadcast %cst_49 : f32 to vector<16x256xf32>
    %110 = arith.select %108, %106, %109 : vector<16x256xi1>, vector<16x256xf32>
    %c0_50 = arith.constant 0 : index
    %c0_51 = arith.constant 0 : index
    %111 = vector.load %arg11[%c0_50, %c0_51] : memref<16x256xf32, #tpu.memory_space<vmem>>, vector<16x256xf32>
    tpu.vector_store %arg11[%c0_50, %c0_51], %110 {strides = array<i32>} : memref<16x256xf32, #tpu.memory_space<vmem>>, vector<16x256xf32>,
    return
  }
}

</mosaic_0001>

<llo_original>
// kernel: tpu_custom_call.1
$region0: #{tpu_custom_call.1}
  #allocation0 [shape = 'u32[]', space=smem, size = 0x4, offset = 0x4, fixed_abs, tag = 'smem constant byte address 0x4 - core index']
  #allocation1 [shape = 'u32[144,128]{1,0:T(1,128)}', space=vmem, size = 0x12000, scoped, tag = 'internal scratch']
  #allocation2 [shape = 'f32[8,256]{1,0:T(8,128)}', space=vmem, size = 0x2000, scoped, tag = 'scratch operand']
  %s0 = inlined_call_operand.vmem [shape: f32[4,256], index: 0, kind: input, shape index: {}]
  %s1 = inlined_call_operand.vmem [shape: f32[8,4], index: 1, kind: input, shape index: {}]
  %s2 = inlined_call_operand.vmem [shape: f32[8,4], index: 2, kind: input, shape index: {}]
  %s3 = inlined_call_operand.vmem [shape: f32[8,4], index: 3, kind: input, shape index: {}]
  %s4 = inlined_call_operand.vmem [shape: f32[8,1], index: 4, kind: input, shape index: {}]
  %s5 = inlined_call_operand.vmem [shape: f32[8,1], index: 5, kind: input, shape index: {}]
  %s6 = inlined_call_operand.vmem [shape: f32[16,8], index: 6, kind: input, shape index: {}]
  %s7 = inlined_call_operand.vmem [shape: f32[16,8], index: 7, kind: input, shape index: {}]
  %s8 = inlined_call_operand.vmem [shape: f32[16,8], index: 8, kind: input, shape index: {}]
  %s9 = inlined_call_operand.vmem [shape: f32[16,1], index: 9, kind: input, shape index: {}]
  %s10 = inlined_call_operand.vmem [shape: f32[16,1], index: 10, kind: input, shape index: {}]
  %s11 = inlined_call_operand.hbm [shape: f32[16,256], index: 11, kind: output, shape index: {}]
  %s12 = sld [smem:[#allocation0]]
  $region54: #{tpu_custom_call.1} parent=0
    _
  %s14 = ssub.s32 1, %s12
  %s15 = scalar_select 0, %s14, %s12
  $region1: #{tpu_custom_call.1} parent=0
    #allocation3 [shape = 'u8[16384]{0}', space=vmem, size = 0x4000, scoped, tag = 'output window, operand 0, single buffered']
    #allocation4 [shape = 's32[1]{0}', space=sflag, size = 0x4, scoped, tag = 'scoped memory for tpu_custom_call.1']
    %16 = vsyncpa [#allocation4], 0
    // Predicated region
    $region2: #{tpu_custom_call.1} parent=1 // pred_check
      _
    $region3: #{tpu_custom_call.1} parent=1 // pred_check_branch
      %18 = sbr.rel (0) target = $region5
    $region4: #{tpu_custom_call.1} parent=1 // pred_region
      _
    $region5: #{tpu_custom_call.1} parent=1 // pred_fallthru
      _
    // Predicated region
    $region6: #{tpu_custom_call.1} parent=1 // pred_check
      _
    $region7: #{tpu_custom_call.1} parent=1 // pred_check_branch
      %20 = sbr.rel (0) target = $region9
    $region8: #{tpu_custom_call.1} parent=1 // pred_region
      _
    $region9: #{tpu_custom_call.1} parent=1 // pred_fallthru
      _
    // Predicated region
    $region10: #{tpu_custom_call.1} parent=1 // pred_check
      _
    $region11: #{tpu_custom_call.1} parent=1 // pred_check_branch
      %22 = sbr.rel (0) target = $region13
    $region12: #{tpu_custom_call.1} parent=1 // pred_region
      _
    $region13: #{tpu_custom_call.1} parent=1 // pred_fallthru
      _
    // Predicated region
    $region14: #{tpu_custom_call.1} parent=1 // pred_check
      _
    $region15: #{tpu_custom_call.1} parent=1 // pred_check_branch
      %24 = sbr.rel (0) target = $region17
    $region16: #{tpu_custom_call.1} parent=1 // pred_region
      _
    $region17: #{tpu_custom_call.1} parent=1 // pred_fallthru
      _
    // Predicated region
    $region18: #{tpu_custom_call.1} parent=1 // pred_check
      _
    $region19: #{tpu_custom_call.1} parent=1 // pred_check_branch
      %26 = sbr.rel (0) target = $region21
    $region20: #{tpu_custom_call.1} parent=1 // pred_region
      _
    $region21: #{tpu_custom_call.1} parent=1 // pred_fallthru
      _
    // Predicated region
    $region22: #{tpu_custom_call.1} parent=1 // pred_check
      _
    $region23: #{tpu_custom_call.1} parent=1 // pred_check_branch
      %28 = sbr.rel (0) target = $region25
    $region24: #{tpu_custom_call.1} parent=1 // pred_region
      _
    $region25: #{tpu_custom_call.1} parent=1 // pred_fallthru
      _
    // Predicated region
    $region26: #{tpu_custom_call.1} parent=1 // pred_check
      _
    $region27: #{tpu_custom_call.1} parent=1 // pred_check_branch
      %30 = sbr.rel (0) target = $region29
    $region28: #{tpu_custom_call.1} parent=1 // pred_region
      _
    $region29: #{tpu_custom_call.1} parent=1 // pred_fallthru
      _
    // Predicated region
    $region30: #{tpu_custom_call.1} parent=1 // pred_check
      _
    $region31: #{tpu_custom_call.1} parent=1 // pred_check_branch
      %32 = sbr.rel (0) target = $region33
    $region32: #{tpu_custom_call.1} parent=1 // pred_region
      _
    $region33: #{tpu_custom_call.1} parent=1 // pred_fallthru
      _
    // Predicated region
    $region34: #{tpu_custom_call.1} parent=1 // pred_check
      _
    $region35: #{tpu_custom_call.1} parent=1 // pred_check_branch
      %34 = sbr.rel (0) target = $region37
    $region36: #{tpu_custom_call.1} parent=1 // pred_region
      _
    $region37: #{tpu_custom_call.1} parent=1 // pred_fallthru
      _
    // Predicated region
    $region38: #{tpu_custom_call.1} parent=1 // pred_check
      _
    $region39: #{tpu_custom_call.1} parent=1 // pred_check_branch
      %36 = sbr.rel (0) target = $region41
    $region40: #{tpu_custom_call.1} parent=1 // pred_region
      _
    $region41: #{tpu_custom_call.1} parent=1 // pred_fallthru
      _
    // Predicated region
    $region42: #{tpu_custom_call.1} parent=1 // pred_check
      _
    $region43: #{tpu_custom_call.1} parent=1 // pred_check_branch
      %38 = sbr.rel (0) target = $region45
    $region44: #{tpu_custom_call.1} parent=1 // pred_region
      _
    $region45: #{tpu_custom_call.1} parent=1 // pred_fallthru
      _
    %v39 = vlaneseq
    %v40 = vand.u32 %v39, 127
    %v41 = vadd.s32 %v40, 128
    %vm42 = vcmp.lt.s32.totalorder %v40, 0
    %v43 = vsub.s32 0, %v40
    %v44 = vsel %vm42, %v43, %v40
    %v45 = vshrl.u32 %v44, 7
    %v46 = vand.u32 %v44, 127
    %v47 = vsub.s32 0, %v46
    %v48 = vsel %vm42, %v47, %v46
    %vm49 = vcmp.lt.s32.totalorder %v41, 0
    %v50 = vsub.s32 0, %v41
    %v51 = vsel %vm49, %v50, %v41
    %v52 = vshrl.u32 %v51, 7
    %v53 = vand.u32 %v51, 127
    %v54 = vsub.s32 0, %v53
    %v55 = vsel %vm49, %v54, %v53
    %vm56 = vcmp.ne.s32.totalorder %v48, 0
    %vm57 = vcmp.ne.s32.totalorder %v55, 0
    %vm58 = vcmp.lt.s32.totalorder %v48, 0
    %vm59 = vcmp.lt.s32.totalorder %v55, 0
    %vm60 = vmand %vm58, %vm56
    %vm61 = vmand %vm59, %vm57
    %v62 = vadd.s32 %v48, 128
    %v63 = vadd.s32 %v55, 128
    %v64 = vsel %vm60, %v62, %v48
    %v65 = vsel %vm61, %v63, %v55
    %v66 = vld [vmem:[%s0] sm:$0xff]
    %v67 = vld [vmem:[%s1] sm:$0xff]
    %v69 = vcombine.high %v66, %v66
    %71 = vrot.lane.b32.xlu0 %v66, 127
    %v72 = vpop.permute.xlu0 %71
    %73 = vrot.lane.b32.xlu0 %v69, 127
    %v74 = vpop.permute.xlu0 %73
    %vm75 = vcmp.lt.s32.totalorder %v40, 127
    %v76 = vsel %vm75, %v72, %v74
    %v77 = vsel %vm75, %v74, %v72
    %v78 = vld [vmem:[%s2] sm:$0xff]
    %vm79 = vcmask 31744
    %v81 = vsel %vm79, %v78, 0
    %vm83 = vcmask 1043456
    %v85 = vsel %vm83, %v76, 0
    %v88 = vsel %vm83, %v77, 0
    %90 = vmatprep.subr.mxu0 0.0
    %91 = vmatpush1.msra.mxu0 0.0
    %92 = vmatprep.subr.mxu0 0.0
    %93 = vmatpush1.msra.mxu0 0.0
    %94 = vmatprep.subr.mxu0 0.0
    %95 = vmatpush1.msra.mxu0 0.0
    %96 = vmatprep.subr.mxu0 0.0
    %97 = vmatpush1.msra.mxu0 0.0
    %98 = vmatprep.subr.mxu0 0.0
    %99 = vmatpush1.msra.mxu0 0.0
    %100 = vmatprep.subr.mxu0 0.0
    %101 = vmatpush1.msra.mxu0 0.0
    %102 = vmatprep.subr.mxu0 0.0
    %103 = vmatpush1.msra.mxu0 0.0
    %104 = vmatprep.subr.mxu0 0.0
    %105 = vmatpush1.msra.mxu0 0.0
    %106 = vmatprep.subr.mxu0 0.0
    %107 = vmatpush1.msra.mxu0 0.0
    %108 = vmatprep.subr.mxu0 0.0
    %109 = vmatpush1.msra.mxu0 0.0
    %110 = vmatprep.subr.mxu0 0.0
    %111 = vmatpush1.msra.mxu0 0.0
    %112 = vmatprep.subr.mxu0 0.0
    %113 = vmatpush1.msra.mxu0 0.0
    %114 = vmatprep.subr.mxu0 0.0
    %115 = vmatpush1.msra.mxu0 0.0
    %116 = vmatprep.subr.mxu0 0.0
    %117 = vmatpush1.msra.mxu0 0.0
    %118 = vmatprep.subr.mxu0 0.0
    %119 = vmatpush1.msra.mxu0 0.0
    %120 = vmatprep.subr.mxu0 %v88
    %121 = vmatpush1.msra.mxu0 %v85
    %122 = vmatprep.subr.mxu0 0.0
    %123 = vmatpush2.msra.mxu0 0.0
    %124 = vmatprep.subr.mxu0 0.0
    %125 = vmatpush2.msra.mxu0 0.0
    %126 = vmatprep.subr.mxu0 0.0
    %127 = vmatpush2.msra.mxu0 0.0
    %128 = vmatprep.subr.mxu0 0.0
    %129 = vmatpush2.msra.mxu0 0.0
    %130 = vmatprep.subr.mxu0 0.0
    %131 = vmatpush2.msra.mxu0 0.0
    %132 = vmatprep.subr.mxu0 0.0
    %133 = vmatpush2.msra.mxu0 0.0
    %134 = vmatprep.subr.mxu0 0.0
    %135 = vmatpush2.msra.mxu0 0.0
    %136 = vmatprep.subr.mxu0 0.0
    %137 = vmatpush2.msra.mxu0 0.0
    %138 = vmatprep.subr.mxu0 0.0
    %139 = vmatpush2.msra.mxu0 0.0
    %140 = vmatprep.subr.mxu0 0.0
    %141 = vmatpush2.msra.mxu0 0.0
    %142 = vmatprep.subr.mxu0 0.0
    %143 = vmatpush2.msra.mxu0 0.0
    %144 = vmatprep.subr.mxu0 0.0
    %145 = vmatpush2.msra.mxu0 0.0
    %146 = vmatprep.subr.mxu0 0.0
    %147 = vmatpush2.msra.mxu0 0.0
    %148 = vmatprep.subr.mxu0 0.0
    %149 = vmatpush2.msra.mxu0 0.0
    %150 = vmatprep.subr.mxu0 0.0
    %151 = vmatpush2.msra.mxu0 0.0
    %152 = vmatprep.subr.mxu0 0.0
    %153 = vmatpush2.msra.mxu0 0.0
    %154 = vmatprep.mubr.f32.mxu0 0.0
    %155 = vmatmul.mubr.f32.gmra.mxu0 %v81
    %v156 = vpop.f32.mrf.mxu0
    %v157 = vadd.f32 0.0, %v156
    %v158 = vpop.f32.mrf.mxu0
    %v159 = vadd.f32 0.0, %v158
    %160 = vdwg.mxu0
    %v162 = vsel %vm79, %v67, 0
    %v164 = vsel %vm83, %v66, 0
    %v166 = vsel %vm83, %v69, 0
    %168 = vmatprep.subr.mxu0 0.0
    %169 = vmatpush1.msra.mxu0 0.0
    %170 = vmatprep.subr.mxu0 0.0
    %171 = vmatpush1.msra.mxu0 0.0
    %172 = vmatprep.subr.mxu0 0.0
    %173 = vmatpush1.msra.mxu0 0.0
    %174 = vmatprep.subr.mxu0 0.0
    %175 = vmatpush1.msra.mxu0 0.0
    %176 = vmatprep.subr.mxu0 0.0
    %177 = vmatpush1.msra.mxu0 0.0
    %178 = vmatprep.subr.mxu0 0.0
    %179 = vmatpush1.msra.mxu0 0.0
    %180 = vmatprep.subr.mxu0 0.0
    %181 = vmatpush1.msra.mxu0 0.0
    %182 = vmatprep.subr.mxu0 0.0
    %183 = vmatpush1.msra.mxu0 0.0
    %184 = vmatprep.subr.mxu0 0.0
    %185 = vmatpush1.msra.mxu0 0.0
    %186 = vmatprep.subr.mxu0 0.0
    %187 = vmatpush1.msra.mxu0 0.0
    %188 = vmatprep.subr.mxu0 0.0
    %189 = vmatpush1.msra.mxu0 0.0
    %190 = vmatprep.subr.mxu0 0.0
    %191 = vmatpush1.msra.mxu0 0.0
    %192 = vmatprep.subr.mxu0 0.0
    %193 = vmatpush1.msra.mxu0 0.0
    %194 = vmatprep.subr.mxu0 0.0
    %195 = vmatpush1.msra.mxu0 0.0
    %196 = vmatprep.subr.mxu0 0.0
    %197 = vmatpush1.msra.mxu0 0.0
    %198 = vmatprep.subr.mxu0 %v166
    %199 = vmatpush1.msra.mxu0 %v164
    %200 = vmatprep.subr.mxu0 0.0
    %201 = vmatpush2.msra.mxu0 0.0
    %202 = vmatprep.subr.mxu0 0.0
    %203 = vmatpush2.msra.mxu0 0.0
    %204 = vmatprep.subr.mxu0 0.0
    %205 = vmatpush2.msra.mxu0 0.0
    %206 = vmatprep.subr.mxu0 0.0
    %207 = vmatpush2.msra.mxu0 0.0
    %208 = vmatprep.subr.mxu0 0.0
    %209 = vmatpush2.msra.mxu0 0.0
    %210 = vmatprep.subr.mxu0 0.0
    %211 = vmatpush2.msra.mxu0 0.0
    %212 = vmatprep.subr.mxu0 0.0
    %213 = vmatpush2.msra.mxu0 0.0
    %214 = vmatprep.subr.mxu0 0.0
    %215 = vmatpush2.msra.mxu0 0.0
    %216 = vmatprep.subr.mxu0 0.0
    %217 = vmatpush2.msra.mxu0 0.0
    %218 = vmatprep.subr.mxu0 0.0
    %219 = vmatpush2.msra.mxu0 0.0
    %220 = vmatprep.subr.mxu0 0.0
    %221 = vmatpush2.msra.mxu0 0.0
    %222 = vmatprep.subr.mxu0 0.0
    %223 = vmatpush2.msra.mxu0 0.0
    %224 = vmatprep.subr.mxu0 0.0
    %225 = vmatpush2.msra.mxu0 0.0
    %226 = vmatprep.subr.mxu0 0.0
    %227 = vmatpush2.msra.mxu0 0.0
    %228 = vmatprep.subr.mxu0 0.0
    %229 = vmatpush2.msra.mxu0 0.0
    %230 = vmatprep.subr.mxu0 0.0
    %231 = vmatpush2.msra.mxu0 0.0
    %232 = vmatprep.mubr.f32.mxu0 0.0
    %233 = vmatmul.mubr.f32.gmra.mxu0 %v162
    %v234 = vpop.f32.mrf.mxu0
    %v235 = vadd.f32 %v157, %v234
    %v236 = vpop.f32.mrf.mxu0
    %v237 = vadd.f32 %v159, %v236
    %238 = vdwg.mxu0
    %239 = vrot.lane.b32.xlu0 %v66, 126
    %v240 = vpop.permute.xlu0 %239
    %241 = vrot.lane.b32.xlu0 %v69, 126
    %v242 = vpop.permute.xlu0 %241
    %vm243 = vcmp.lt.s32.totalorder %v40, 126
    %v244 = vsel %vm243, %v240, %v242
    %v245 = vsel %vm243, %v242, %v240
    %v246 = vld [vmem:[%s3] sm:$0xff]
    %v248 = vsel %vm79, %v246, 0
    %v251 = vsel %vm83, %v244, 0
    %v254 = vsel %vm83, %v245, 0
    %256 = vmatprep.subr.mxu0 0.0
    %257 = vmatpush1.msra.mxu0 0.0
    %258 = vmatprep.subr.mxu0 0.0
    %259 = vmatpush1.msra.mxu0 0.0
    %260 = vmatprep.subr.mxu0 0.0
    %261 = vmatpush1.msra.mxu0 0.0
    %262 = vmatprep.subr.mxu0 0.0
    %263 = vmatpush1.msra.mxu0 0.0
    %264 = vmatprep.subr.mxu0 0.0
    %265 = vmatpush1.msra.mxu0 0.0
    %266 = vmatprep.subr.mxu0 0.0
    %267 = vmatpush1.msra.mxu0 0.0
    %268 = vmatprep.subr.mxu0 0.0
    %269 = vmatpush1.msra.mxu0 0.0
    %270 = vmatprep.subr.mxu0 0.0
    %271 = vmatpush1.msra.mxu0 0.0
    %272 = vmatprep.subr.mxu0 0.0
    %273 = vmatpush1.msra.mxu0 0.0
    %274 = vmatprep.subr.mxu0 0.0
    %275 = vmatpush1.msra.mxu0 0.0
    %276 = vmatprep.subr.mxu0 0.0
    %277 = vmatpush1.msra.mxu0 0.0
    %278 = vmatprep.subr.mxu0 0.0
    %279 = vmatpush1.msra.mxu0 0.0
    %280 = vmatprep.subr.mxu0 0.0
    %281 = vmatpush1.msra.mxu0 0.0
    %282 = vmatprep.subr.mxu0 0.0
    %283 = vmatpush1.msra.mxu0 0.0
    %284 = vmatprep.subr.mxu0 0.0
    %285 = vmatpush1.msra.mxu0 0.0
    %286 = vmatprep.subr.mxu0 %v254
    %287 = vmatpush1.msra.mxu0 %v251
    %288 = vmatprep.subr.mxu0 0.0
    %289 = vmatpush2.msra.mxu0 0.0
    %290 = vmatprep.subr.mxu0 0.0
    %291 = vmatpush2.msra.mxu0 0.0
    %292 = vmatprep.subr.mxu0 0.0
    %293 = vmatpush2.msra.mxu0 0.0
    %294 = vmatprep.subr.mxu0 0.0
    %295 = vmatpush2.msra.mxu0 0.0
    %296 = vmatprep.subr.mxu0 0.0
    %297 = vmatpush2.msra.mxu0 0.0
    %298 = vmatprep.subr.mxu0 0.0
    %299 = vmatpush2.msra.mxu0 0.0
    %300 = vmatprep.subr.mxu0 0.0
    %301 = vmatpush2.msra.mxu0 0.0
    %302 = vmatprep.subr.mxu0 0.0
    %303 = vmatpush2.msra.mxu0 0.0
    %304 = vmatprep.subr.mxu0 0.0
    %305 = vmatpush2.msra.mxu0 0.0
    %306 = vmatprep.subr.mxu0 0.0
    %307 = vmatpush2.msra.mxu0 0.0
    %308 = vmatprep.subr.mxu0 0.0
    %309 = vmatpush2.msra.mxu0 0.0
    %310 = vmatprep.subr.mxu0 0.0
    %311 = vmatpush2.msra.mxu0 0.0
    %312 = vmatprep.subr.mxu0 0.0
    %313 = vmatpush2.msra.mxu0 0.0
    %314 = vmatprep.subr.mxu0 0.0
    %315 = vmatpush2.msra.mxu0 0.0
    %316 = vmatprep.subr.mxu0 0.0
    %317 = vmatpush2.msra.mxu0 0.0
    %318 = vmatprep.subr.mxu0 0.0
    %319 = vmatpush2.msra.mxu0 0.0
    %320 = vmatprep.mubr.f32.mxu0 0.0
    %321 = vmatmul.mubr.f32.gmra.mxu0 %v248
    %v322 = vpop.f32.mrf.mxu0
    %v323 = vadd.f32 0.0, %v322
    %v324 = vpop.f32.mrf.mxu0
    %v325 = vadd.f32 0.0, %v324
    %326 = vdwg.mxu0
    %v327 = vadd.f32 %v235, %v323
    %v328 = vadd.f32 %v237, %v325
    %vm329 = vcmp.lt.s32.totalorder %v64, 18
    %vm330 = vcmp.lt.s32.totalorder %v65, 18
    %v331 = vsel %vm329, 1, 0
    %v332 = vsel %vm330, 1, 0
    %vm333 = vcmp.eq.s32.totalorder %v331, 1
    %vm334 = vcmp.eq.s32.totalorder %v332, 1
    %v335 = vsel %vm333, %v327, 0.0
    %v336 = vsel %vm334, %v328, 0.0
    %v337 = vadd.f32 %v335, %v336
    %338 = vadd.xlane.f32.xlu0 %v337
    %v339 = vpop.xlane.xlu0 %338
    %v340 = vmul.f32 %v339, 0.027777778
    %v341 = vmul.f32 %v335, %v335
    %v342 = vmul.f32 %v336, %v336
    %v343 = vadd.f32 %v341, %v342
    %344 = vadd.xlane.f32.xlu0 %v343
    %v345 = vpop.xlane.xlu0 %344
    %v346 = vmul.f32 %v345, 0.027777778
    %v347 = vmul.f32 %v340, %v340
    %v348 = vsub.f32 %v346, %v347
    %v349 = vld [vmem:[%s4] sm:$0xff]
    %v350 = vadd.f32 %v348, 1e-05
    %v351 = vrsqrt.pop %v350
    %v352 = vmul.f32 %v349, %v351
    %v353 = vld [vmem:[%s5] sm:$0xff]
    %v354 = vmul.f32 %v340, %v352
    %v355 = vsub.f32 %v353, %v354
    %357 = vset.pattern.permute.xlu0 0
    %358 = vperm.xlu0 %357, %v352
    %v359 = vpop.permute.xlu0 %358
    %v361 = vmul.f32 %v335, %v359
    %v362 = vmul.f32 %v336, %v359
    %364 = vset.pattern.permute.xlu0 0
    %365 = vperm.xlu0 %364, %v355
    %v366 = vpop.permute.xlu0 %365
    %v368 = vadd.f32 %v361, %v366
    %v369 = vadd.f32 %v362, %v366
    %v370 = vmax.f32 %v368, 0.0
    %v371 = vmax.f32 %v369, 0.0
    %v372 = vsel %vm333, %v370, 0.0
    %v373 = vsel %vm334, %v371, 0.0
    %374 = vrot.lane.b32.xlu0 %v372, 4
    %v375 = vpop.permute.xlu0 %374
    %376 = vrot.lane.b32.xlu0 %v373, 4
    %v377 = vpop.permute.xlu0 %376
    %vm378 = vcmp.lt.s32.totalorder %v40, 4
    %v379 = vsel %vm378, %v375, %v377
    %v380 = vsel %vm378, %v377, %v375
    %381 = vst [vmem:[#allocation2] sm:$0xff] %v380
    %382 = vst [vmem:[#allocation2 + $0x8] sm:$0xff] %v379
    %v383 = vld [vmem:[#allocation2] sm:$0xff]
    %v384 = vld [vmem:[#allocation2 + $0x8] sm:$0xff]
    %v385 = vld [vmem:[%s6] sm:$0xff]
    %v386 = vld [vmem:[%s6 + $0x8] sm:$0xff]
    %387 = vrot.lane.b32.xlu0 %v383, 126
    %v388 = vpop.permute.xlu0 %387
    %389 = vrot.lane.b32.xlu0 %v384, 126
    %v390 = vpop.permute.xlu0 %389
    %v391 = vsel %vm243, %v388, %v390
    %v392 = vsel %vm243, %v390, %v388
    %v393 = vld [vmem:[%s7] sm:$0xff]
    %v394 = vld [vmem:[%s7 + $0x8] sm:$0xff]
    %vm395 = vcmask 64512
    %v397 = vsel %vm395, %v393, 0
    %v400 = vsel %vm395, %v394, 0
    %402 = vmatprep.subr.mxu0 0.0
    %403 = vmatpush1.msra.mxu0 0.0
    %404 = vmatprep.subr.mxu0 0.0
    %405 = vmatpush1.msra.mxu0 0.0
    %406 = vmatprep.subr.mxu0 0.0
    %407 = vmatpush1.msra.mxu0 0.0
    %408 = vmatprep.subr.mxu0 0.0
    %409 = vmatpush1.msra.mxu0 0.0
    %410 = vmatprep.subr.mxu0 0.0
    %411 = vmatpush1.msra.mxu0 0.0
    %412 = vmatprep.subr.mxu0 0.0
    %413 = vmatpush1.msra.mxu0 0.0
    %414 = vmatprep.subr.mxu0 0.0
    %415 = vmatpush1.msra.mxu0 0.0
    %416 = vmatprep.subr.mxu0 0.0
    %417 = vmatpush1.msra.mxu0 0.0
    %418 = vmatprep.subr.mxu0 0.0
    %419 = vmatpush1.msra.mxu0 0.0
    %420 = vmatprep.subr.mxu0 0.0
    %421 = vmatpush1.msra.mxu0 0.0
    %422 = vmatprep.subr.mxu0 0.0
    %423 = vmatpush1.msra.mxu0 0.0
    %424 = vmatprep.subr.mxu0 0.0
    %425 = vmatpush1.msra.mxu0 0.0
    %426 = vmatprep.subr.mxu0 0.0
    %427 = vmatpush1.msra.mxu0 0.0
    %428 = vmatprep.subr.mxu0 0.0
    %429 = vmatpush1.msra.mxu0 0.0
    %430 = vmatprep.subr.mxu0 0.0
    %431 = vmatpush1.msra.mxu0 0.0
    %432 = vmatprep.subr.mxu0 %v392
    %433 = vmatpush1.msra.mxu0 %v391
    %434 = vmatprep.subr.mxu0 0.0
    %435 = vmatpush2.msra.mxu0 0.0
    %436 = vmatprep.subr.mxu0 0.0
    %437 = vmatpush2.msra.mxu0 0.0
    %438 = vmatprep.subr.mxu0 0.0
    %439 = vmatpush2.msra.mxu0 0.0
    %440 = vmatprep.subr.mxu0 0.0
    %441 = vmatpush2.msra.mxu0 0.0
    %442 = vmatprep.subr.mxu0 0.0
    %443 = vmatpush2.msra.mxu0 0.0
    %444 = vmatprep.subr.mxu0 0.0
    %445 = vmatpush2.msra.mxu0 0.0
    %446 = vmatprep.subr.mxu0 0.0
    %447 = vmatpush2.msra.mxu0 0.0
    %448 = vmatprep.subr.mxu0 0.0
    %449 = vmatpush2.msra.mxu0 0.0
    %450 = vmatprep.subr.mxu0 0.0
    %451 = vmatpush2.msra.mxu0 0.0
    %452 = vmatprep.subr.mxu0 0.0
    %453 = vmatpush2.msra.mxu0 0.0
    %454 = vmatprep.subr.mxu0 0.0
    %455 = vmatpush2.msra.mxu0 0.0
    %456 = vmatprep.subr.mxu0 0.0
    %457 = vmatpush2.msra.mxu0 0.0
    %458 = vmatprep.subr.mxu0 0.0
    %459 = vmatpush2.msra.mxu0 0.0
    %460 = vmatprep.subr.mxu0 0.0
    %461 = vmatpush2.msra.mxu0 0.0
    %462 = vmatprep.subr.mxu0 0.0
    %463 = vmatpush2.msra.mxu0 0.0
    %464 = vmatprep.subr.mxu0 0.0
    %465 = vmatpush2.msra.mxu0 0.0
    %466 = vmatprep.mubr.f32.mxu0 0.0
    %467 = vmatmul.mubr.f32.gmra.mxu0 %v397
    %v468 = vpop.f32.mrf.mxu0
    %v469 = vadd.f32 0.0, %v468
    %v470 = vpop.f32.mrf.mxu0
    %v471 = vadd.f32 0.0, %v470
    %472 = vmatprep.mubr.f32.mxu0 0.0
    %473 = vmatmul.mubr.f32.gmra.mxu0 %v400
    %v474 = vpop.f32.mrf.mxu0
    %v475 = vadd.f32 0.0, %v474
    %v476 = vpop.f32.mrf.mxu0
    %v477 = vadd.f32 0.0, %v476
    %478 = vdwg.mxu0
    %v480 = vsel %vm395, %v385, 0
    %v483 = vsel %vm395, %v386, 0
    %485 = vmatprep.subr.mxu0 0.0
    %486 = vmatpush1.msra.mxu0 0.0
    %487 = vmatprep.subr.mxu0 0.0
    %488 = vmatpush1.msra.mxu0 0.0
    %489 = vmatprep.subr.mxu0 0.0
    %490 = vmatpush1.msra.mxu0 0.0
    %491 = vmatprep.subr.mxu0 0.0
    %492 = vmatpush1.msra.mxu0 0.0
    %493 = vmatprep.subr.mxu0 0.0
    %494 = vmatpush1.msra.mxu0 0.0
    %495 = vmatprep.subr.mxu0 0.0
    %496 = vmatpush1.msra.mxu0 0.0
    %497 = vmatprep.subr.mxu0 0.0
    %498 = vmatpush1.msra.mxu0 0.0
    %499 = vmatprep.subr.mxu0 0.0
    %500 = vmatpush1.msra.mxu0 0.0
    %501 = vmatprep.subr.mxu0 0.0
    %502 = vmatpush1.msra.mxu0 0.0
    %503 = vmatprep.subr.mxu0 0.0
    %504 = vmatpush1.msra.mxu0 0.0
    %505 = vmatprep.subr.mxu0 0.0
    %506 = vmatpush1.msra.mxu0 0.0
    %507 = vmatprep.subr.mxu0 0.0
    %508 = vmatpush1.msra.mxu0 0.0
    %509 = vmatprep.subr.mxu0 0.0
    %510 = vmatpush1.msra.mxu0 0.0
    %511 = vmatprep.subr.mxu0 0.0
    %512 = vmatpush1.msra.mxu0 0.0
    %513 = vmatprep.subr.mxu0 0.0
    %514 = vmatpush1.msra.mxu0 0.0
    %515 = vmatprep.subr.mxu0 %v384
    %516 = vmatpush1.msra.mxu0 %v383
    %517 = vmatprep.subr.mxu0 0.0
    %518 = vmatpush2.msra.mxu0 0.0
    %519 = vmatprep.subr.mxu0 0.0
    %520 = vmatpush2.msra.mxu0 0.0
    %521 = vmatprep.subr.mxu0 0.0
    %522 = vmatpush2.msra.mxu0 0.0
    %523 = vmatprep.subr.mxu0 0.0
    %524 = vmatpush2.msra.mxu0 0.0
    %525 = vmatprep.subr.mxu0 0.0
    %526 = vmatpush2.msra.mxu0 0.0
    %527 = vmatprep.subr.mxu0 0.0
    %528 = vmatpush2.msra.mxu0 0.0
    %529 = vmatprep.subr.mxu0 0.0
    %530 = vmatpush2.msra.mxu0 0.0
    %531 = vmatprep.subr.mxu0 0.0
    %532 = vmatpush2.msra.mxu0 0.0
    %533 = vmatprep.subr.mxu0 0.0
    %534 = vmatpush2.msra.mxu0 0.0
    %535 = vmatprep.subr.mxu0 0.0
    %536 = vmatpush2.msra.mxu0 0.0
    %537 = vmatprep.subr.mxu0 0.0
    %538 = vmatpush2.msra.mxu0 0.0
    %539 = vmatprep.subr.mxu0 0.0
    %540 = vmatpush2.msra.mxu0 0.0
    %541 = vmatprep.subr.mxu0 0.0
    %542 = vmatpush2.msra.mxu0 0.0
    %543 = vmatprep.subr.mxu0 0.0
    %544 = vmatpush2.msra.mxu0 0.0
    %545 = vmatprep.subr.mxu0 0.0
    %546 = vmatpush2.msra.mxu0 0.0
    %547 = vmatprep.subr.mxu0 0.0
    %548 = vmatpush2.msra.mxu0 0.0
    %549 = vmatprep.mubr.f32.mxu0 0.0
    %550 = vmatmul.mubr.f32.gmra.mxu0 %v480
    %v551 = vpop.f32.mrf.mxu0
    %v552 = vadd.f32 %v469, %v551
    %v553 = vpop.f32.mrf.mxu0
    %v554 = vadd.f32 %v471, %v553
    %555 = vmatprep.mubr.f32.mxu0 0.0
    %556 = vmatmul.mubr.f32.gmra.mxu0 %v483
    %v557 = vpop.f32.mrf.mxu0
    %v558 = vadd.f32 %v475, %v557
    %v559 = vpop.f32.mrf.mxu0
    %v560 = vadd.f32 %v477, %v559
    %561 = vdwg.mxu0
    %562 = vrot.lane.b32.xlu0 %v383, 124
    %v563 = vpop.permute.xlu0 %562
    %564 = vrot.lane.b32.xlu0 %v384, 124
    %v565 = vpop.permute.xlu0 %564
    %vm566 = vcmp.lt.s32.totalorder %v40, 124
    %v567 = vsel %vm566, %v563, %v565
    %v568 = vsel %vm566, %v565, %v563
    %v569 = vld [vmem:[%s8] sm:$0xff]
    %v570 = vld [vmem:[%s8 + $0x8] sm:$0xff]
    %v572 = vsel %vm395, %v569, 0
    %v575 = vsel %vm395, %v570, 0
    %577 = vmatprep.subr.mxu0 0.0
    %578 = vmatpush1.msra.mxu0 0.0
    %579 = vmatprep.subr.mxu0 0.0
    %580 = vmatpush1.msra.mxu0 0.0
    %581 = vmatprep.subr.mxu0 0.0
    %582 = vmatpush1.msra.mxu0 0.0
    %583 = vmatprep.subr.mxu0 0.0
    %584 = vmatpush1.msra.mxu0 0.0
    %585 = vmatprep.subr.mxu0 0.0
    %586 = vmatpush1.msra.mxu0 0.0
    %587 = vmatprep.subr.mxu0 0.0
    %588 = vmatpush1.msra.mxu0 0.0
    %589 = vmatprep.subr.mxu0 0.0
    %590 = vmatpush1.msra.mxu0 0.0
    %591 = vmatprep.subr.mxu0 0.0
    %592 = vmatpush1.msra.mxu0 0.0
    %593 = vmatprep.subr.mxu0 0.0
    %594 = vmatpush1.msra.mxu0 0.0
    %595 = vmatprep.subr.mxu0 0.0
    %596 = vmatpush1.msra.mxu0 0.0
    %597 = vmatprep.subr.mxu0 0.0
    %598 = vmatpush1.msra.mxu0 0.0
    %599 = vmatprep.subr.mxu0 0.0
    %600 = vmatpush1.msra.mxu0 0.0
    %601 = vmatprep.subr.mxu0 0.0
    %602 = vmatpush1.msra.mxu0 0.0
    %603 = vmatprep.subr.mxu0 0.0
    %604 = vmatpush1.msra.mxu0 0.0
    %605 = vmatprep.subr.mxu0 0.0
    %606 = vmatpush1.msra.mxu0 0.0
    %607 = vmatprep.subr.mxu0 %v568
    %608 = vmatpush1.msra.mxu0 %v567
    %609 = vmatprep.subr.mxu0 0.0
    %610 = vmatpush2.msra.mxu0 0.0
    %611 = vmatprep.subr.mxu0 0.0
    %612 = vmatpush2.msra.mxu0 0.0
    %613 = vmatprep.subr.mxu0 0.0
    %614 = vmatpush2.msra.mxu0 0.0
    %615 = vmatprep.subr.mxu0 0.0
    %616 = vmatpush2.msra.mxu0 0.0
    %617 = vmatprep.subr.mxu0 0.0
    %618 = vmatpush2.msra.mxu0 0.0
    %619 = vmatprep.subr.mxu0 0.0
    %620 = vmatpush2.msra.mxu0 0.0
    %621 = vmatprep.subr.mxu0 0.0
    %622 = vmatpush2.msra.mxu0 0.0
    %623 = vmatprep.subr.mxu0 0.0
    %624 = vmatpush2.msra.mxu0 0.0
    %625 = vmatprep.subr.mxu0 0.0
    %626 = vmatpush2.msra.mxu0 0.0
    %627 = vmatprep.subr.mxu0 0.0
    %628 = vmatpush2.msra.mxu0 0.0
    %629 = vmatprep.subr.mxu0 0.0
    %630 = vmatpush2.msra.mxu0 0.0
    %631 = vmatprep.subr.mxu0 0.0
    %632 = vmatpush2.msra.mxu0 0.0
    %633 = vmatprep.subr.mxu0 0.0
    %634 = vmatpush2.msra.mxu0 0.0
    %635 = vmatprep.subr.mxu0 0.0
    %636 = vmatpush2.msra.mxu0 0.0
    %637 = vmatprep.subr.mxu0 0.0
    %638 = vmatpush2.msra.mxu0 0.0
    %639 = vmatprep.subr.mxu0 0.0
    %640 = vmatpush2.msra.mxu0 0.0
    %641 = vmatprep.mubr.f32.mxu0 0.0
    %642 = vmatmul.mubr.f32.gmra.mxu0 %v572
    %v643 = vpop.f32.mrf.mxu0
    %v644 = vadd.f32 0.0, %v643
    %v645 = vpop.f32.mrf.mxu0
    %v646 = vadd.f32 0.0, %v645
    %647 = vmatprep.mubr.f32.mxu0 0.0
    %648 = vmatmul.mubr.f32.gmra.mxu0 %v575
    %v649 = vpop.f32.mrf.mxu0
    %v650 = vadd.f32 0.0, %v649
    %v651 = vpop.f32.mrf.mxu0
    %v652 = vadd.f32 0.0, %v651
    %653 = vdwg.mxu0
    %v654 = vadd.f32 %v552, %v644
    %v655 = vadd.f32 %v554, %v646
    %v656 = vadd.f32 %v558, %v650
    %v657 = vadd.f32 %v560, %v652
    %vm658 = vcmp.lt.s32.totalorder %v64, 22
    %vm659 = vcmp.lt.s32.totalorder %v65, 22
    %v660 = vsel %vm658, 1, 0
    %v661 = vsel %vm659, 1, 0
    %vm662 = vcmp.eq.s32.totalorder %v660, 1
    %vm663 = vcmp.eq.s32.totalorder %v661, 1
    %v664 = vsel %vm662, %v654, 0.0
    %v665 = vsel %vm663, %v655, 0.0
    %v666 = vsel %vm662, %v656, 0.0
    %v667 = vsel %vm663, %v657, 0.0
    %v668 = vadd.f32 %v664, %v665
    %669 = vadd.xlane.f32.xlu0 %v668
    %v670 = vpop.xlane.xlu0 %669
    %v671 = vadd.f32 %v666, %v667
    %672 = vadd.xlane.f32.xlu0 %v671
    %v673 = vpop.xlane.xlu0 %672
    %v674 = vmul.f32 %v670, 0.022727273
    %v675 = vmul.f32 %v673, 0.022727273
    %v676 = vmul.f32 %v664, %v664
    %v677 = vmul.f32 %v665, %v665
    %v678 = vmul.f32 %v666, %v666
    %v679 = vmul.f32 %v667, %v667
    %v680 = vadd.f32 %v676, %v677
    %681 = vadd.xlane.f32.xlu0 %v680
    %v682 = vpop.xlane.xlu0 %681
    %v683 = vadd.f32 %v678, %v679
    %684 = vadd.xlane.f32.xlu0 %v683
    %v685 = vpop.xlane.xlu0 %684
    %v686 = vmul.f32 %v682, 0.022727273
    %v687 = vmul.f32 %v685, 0.022727273
    %v688 = vmul.f32 %v674, %v674
    %v689 = vmul.f32 %v675, %v675
    %v690 = vsub.f32 %v686, %v688
    %v691 = vsub.f32 %v687, %v689
    %v692 = vld [vmem:[%s9] sm:$0xff]
    %v693 = vld [vmem:[%s9 + $0x8] sm:$0xff]
    %v694 = vadd.f32 %v690, 1e-05
    %v695 = vadd.f32 %v691, 1e-05
    %v696 = vrsqrt.pop %v694
    %v697 = vrsqrt.pop %v695
    %v698 = vmul.f32 %v692, %v696
    %v699 = vmul.f32 %v693, %v697
    %v700 = vld [vmem:[%s10] sm:$0xff]
    %v701 = vld [vmem:[%s10 + $0x8] sm:$0xff]
    %v702 = vmul.f32 %v674, %v698
    %v703 = vmul.f32 %v675, %v699
    %v704 = vsub.f32 %v700, %v702
    %v705 = vsub.f32 %v701, %v703
    %707 = vset.pattern.permute.xlu0 0
    %708 = vperm.xlu0 %707, %v698
    %v709 = vpop.permute.xlu0 %708
    %712 = vset.pattern.permute.xlu0 0
    %713 = vperm.xlu0 %712, %v699
    %v714 = vpop.permute.xlu0 %713
    %v716 = vmul.f32 %v664, %v709
    %v717 = vmul.f32 %v665, %v709
    %v718 = vmul.f32 %v666, %v714
    %v719 = vmul.f32 %v667, %v714
    %721 = vset.pattern.permute.xlu0 0
    %722 = vperm.xlu0 %721, %v704
    %v723 = vpop.permute.xlu0 %722
    %726 = vset.pattern.permute.xlu0 0
    %727 = vperm.xlu0 %726, %v705
    %v728 = vpop.permute.xlu0 %727
    %v730 = vadd.f32 %v716, %v723
    %v731 = vadd.f32 %v717, %v723
    %v732 = vadd.f32 %v718, %v728
    %v733 = vadd.f32 %v719, %v728
    %v734 = vmax.f32 %v730, 0.0
    %v735 = vmax.f32 %v731, 0.0
    %v736 = vmax.f32 %v732, 0.0
    %v737 = vmax.f32 %v733, 0.0
    %v738 = vsel %vm662, %v734, 0.0
    %v739 = vsel %vm663, %v735, 0.0
    %v740 = vsel %vm662, %v736, 0.0
    %v741 = vsel %vm663, %v737, 0.0
    %742 = vst [vmem:[#allocation3] sm:$0xff] %v738
    %743 = vst [vmem:[#allocation3 + $0x8] sm:$0xff] %v739
    %744 = vst [vmem:[#allocation3 + $0x10] sm:$0xff] %v740
    %745 = vst [vmem:[#allocation3 + $0x18] sm:$0xff] %v741
    // Predicated region
    $region46: #{tpu_custom_call.1} parent=1 // pred_check
      _
    $region47: #{tpu_custom_call.1} parent=1 // pred_check_branch
      %747 = sbr.rel (0) target = $region49
    $region48: #{tpu_custom_call.1} parent=1 // pred_region
      %s749 = ssub.s32 512, 512
      %750 = vsyncadd [#allocation4], %s749
      %s751 = sshll.u32 [#allocation3], 4
      %s752 = int_to_ptr.vmem [resolvable:$true] %s751
      %757 = dma.vmem_to_hbm [thread:$0]  %s752, 512, %s11, [#allocation4], 256, 256, 16
    $region49: #{tpu_custom_call.1} parent=1 // pred_fallthru
      _
    // Predicated region
    $region50: #{tpu_custom_call.1} parent=1 // pred_check
      _
    $region51: #{tpu_custom_call.1} parent=1 // pred_check_branch
      %759 = sbr.rel (0) target = $region53
    $region52: #{tpu_custom_call.1} parent=1 // pred_region
      %760 = dma.done [#allocation4], 512
    $region53: #{tpu_custom_call.1} parent=1 // pred_fallthru
      _
    %761 = vsyncpa [#allocation4], 1

</llo_original>
